<compile_context>
chip_gen: v7x
topology: tpu7x:2x2x1
jax: 0.10.0
libtpu: 0.0.40
codegen_flags: <defaults>
</compile_context>

<pallas_src>
import numpy as np
import jax
import jax.numpy as jnp
from jax.experimental import pallas as pl
from jax.experimental.pallas import tpu as pltpu


_TARGET_BLOCK_ELEMS = 512 * 1024  # ~2 MiB (f32) per array per grid step


def _lcm(a, b):
    return int(a) * int(b) // int(np.gcd(int(a), int(b)))


def _make_focal_kernel(gamma, use_bw):
    gamma = float(gamma)

    def kernel(*refs):
        if use_bw:
            x_ref, t_ref, bw_ref, o_ref = refs
        else:
            x_ref, t_ref, o_ref = refs
            bw_ref = None

        # f32 math everywhere (v5e has no bf16 VPU/EUP; keeps 1e-5 trim exact).
        x = x_ref[...].astype(jnp.float32)
        t = t_ref[...].astype(jnp.float32)

        # One heavy transcendental chain: log(sigmoid(x)); log(sigmoid(-x)) = lsp - x.
        lsp = jax.nn.log_sigmoid(x)
        lsn = lsp - x

        pos_term = t * lsp
        if use_bw:
            pos_term = pos_term * bw_ref[...].astype(jnp.float32)  # (1, L) broadcast
        bce = -pos_term - (1.0 - t) * lsn

        if gamma == 0.0:
            # focal_weight**0 == 1 (matches torch.pow, including 0**0).
            cls_loss = bce
        else:
            # where(t==1, 1-p, p) ** gamma == exp(gamma * selected log-prob)
            log_fw = jnp.where(t == 1.0, lsn, lsp)
            cls_loss = jnp.exp(gamma * log_fw) * bce
        # TODO(synk): optional integer-gamma fast path (hand-rolled sigmoid +
        # VPU squaring) only if profiling ever shows the EUP slot binding (v5e).

        # Fused select: zero ignored (-1) targets and trim losses < 1e-5.
        keep = (t != -1.0) & (cls_loss >= 1e-5)
        o_ref[...] = jnp.where(keep, cls_loss, 0.0).astype(o_ref.dtype)

    return kernel


def sigmoid_focal_loss(classification, targets, gamma=0.0, balance_weights=None):
    """Pallas implementation of SigmoidFocalLoss.forward.

    classification: [..., num_classes] logits (any float dtype)
    targets:        [..., num_classes] values in {-1, 0, 1}.  Pass the
                    narrowest dtype available (e.g. int8): this kernel is
                    HBM-bound and targets bytes/elem directly set the roofline.
    balance_weights: optional [num_classes] or [1]; None means all-ones (skipped)
    returns:        [..., num_classes] per-element loss in classification.dtype
    """
    orig_shape = classification.shape
    num_classes = int(orig_shape[-1]) if len(orig_shape) > 0 else 1
    out_dtype = classification.dtype
    total = int(np.prod(orig_shape)) if len(orig_shape) > 0 else 1

    # Lane-dense width: smallest multiple of both 128 and num_classes, so every
    # store is a full unmasked 128-lane vst and the per-class balance-weight
    # pattern repeats exactly within one row (class == column % C).
    lanes = _lcm(num_classes, 128)

    x = classification.reshape(-1)
    t = targets.reshape(-1)

    pad = (-total) % lanes
    if pad:
        # Rare ragged fallback: pad/slice cost extra HBM passes; common
        # detection-head shapes hit pad == 0 and skip this entirely.
        x = jnp.pad(x, (0, pad))
        t = jnp.pad(t, (0, pad))
    n_rows = (total + pad) // lanes
    x = x.reshape(n_rows, lanes)
    t = t.reshape(n_rows, lanes)

    # Row tile: ~_TARGET_BLOCK_ELEMS per block, multiple of 8.  When everything
    # would fit a single block, cap at ceil(n_rows/2) so the "parallel" grid has
    # >= 2 steps and both v7x TensorCores get work (harmless on v5e/v6e).
    # The ragged last row-block is handled by Pallas write masking.
    target_rows = max(8, (_TARGET_BLOCK_ELEMS // lanes) // 8 * 8)
    if n_rows <= 8:
        row_tile = n_rows
    else:
        tile = min(target_rows, (n_rows + 1) // 2)
        row_tile = max(8, ((tile + 7) // 8) * 8)
    grid = (pl.cdiv(n_rows, row_tile),)

    use_bw = balance_weights is not None
    in_arrays = [x, t]
    in_specs = [
        pl.BlockSpec((row_tile, lanes), lambda i: (i, 0)),
        pl.BlockSpec((row_tile, lanes), lambda i: (i, 0)),
    ]
    if use_bw:
        bw = jnp.asarray(balance_weights, jnp.float32).reshape(-1)
        bw = jnp.broadcast_to(bw, (num_classes,))
        bw_tiled = jnp.tile(bw, lanes // num_classes).reshape(1, lanes)
        in_arrays.append(bw_tiled)
        in_specs.append(pl.BlockSpec((1, lanes), lambda i: (0, 0)))

    out = pl.pallas_call(
        _make_focal_kernel(gamma, use_bw),
        out_shape=jax.ShapeDtypeStruct((n_rows, lanes), out_dtype),
        grid=grid,
        in_specs=in_specs,
        out_specs=pl.BlockSpec((row_tile, lanes), lambda i: (i, 0)),
        compiler_params=pltpu.CompilerParams(
            dimension_semantics=("parallel",),
            vmem_limit_bytes=48 * 1024 * 1024,  # under v7x's 64 MiB physical VMEM
        ),
    )(*in_arrays)

    out = out.reshape(-1)
    if pad:
        out = out[:total]
    return out.reshape(orig_shape)


def _reference(classification, targets, gamma, balance_weights):
    x = classification.astype(jnp.float32)
    t = targets.astype(jnp.float32)
    probs = jax.nn.sigmoid(x)
    focal_weight = jnp.where(t == 1.0, 1.0 - probs, probs)
    focal_weight = jnp.power(focal_weight, gamma)
    bce = (-(t * jax.nn.log_sigmoid(x)) * balance_weights
           - (1.0 - t) * jax.nn.log_sigmoid(-x))
    cls_loss = focal_weight * bce
    cls_loss = jnp.where(t != -1.0, cls_loss, jnp.zeros_like(cls_loss))
    cls_loss = jnp.where(cls_loss < 1e-5, jnp.zeros_like(cls_loss), cls_loss)
    return cls_loss.astype(classification.dtype)


if __name__ == "__main__":
    key = jax.random.PRNGKey(0)
    k1, k2 = jax.random.split(key)

    # [batch, num_anchors, num_classes]; total = 4224 = 33 * 128 so the no-pad
    # fast path is taken, and 33 rows / row_tile 24 exercises the ragged
    # (masked) last row-block and a 2-step "parallel" grid.
    B, A, C = 2, 528, 4
    gamma = 2.0

    classification = jax.random.normal(k1, (B, A, C), dtype=jnp.float32) * 2.0
    # targets in {-1 (ignored), 0, 1}; narrow int8 dtype, cast happens in-kernel
    targets = jax.random.randint(k2, (B, A, C), minval=-1, maxval=2).astype(jnp.int8)

    # Non-trivial per-class weights to exercise the balance-weight path.
    balance_weights = jnp.array([1.0, 2.0, 0.5, 1.5], dtype=jnp.float32)

    out = sigmoid_focal_loss(classification, targets, gamma=gamma,
                             balance_weights=balance_weights)
    out = jax.block_until_ready(out)

    ref = _reference(classification, targets, gamma, balance_weights)
    np.testing.assert_allclose(np.asarray(out), np.asarray(ref),
                               rtol=1e-5, atol=2e-5)

    print("KERNEL_OK")
</pallas_src>

<mosaic_0001>
module attributes {stable_mosaic.version = 11 : i64} {
  func.func @kernel(%arg0: i32, %arg1: memref<24x128xf32, #tpu.memory_space<vmem>>, %arg2: memref<24x128xi8, #tpu.memory_space<vmem>>, %arg3: memref<1x128xf32, #tpu.memory_space<vmem>>, %arg4: memref<24x128xf32, #tpu.memory_space<vmem>>) attributes {dimension_semantics = [#tpu.dimension_semantics<parallel>], iteration_bounds = array<i64: 2>, scalar_prefetch = 0 : i64, scratch_operands = 0 : i64, tpu.core_type = #tpu.core_type<tc>, window_params = [{transform_indices = @transform_0, window_bounds = array<i64: 24, 128>}, {transform_indices = @transform_1, window_bounds = array<i64: 24, 128>}, {pipeline_mode = #tpu.pipeline_mode<synchronous>, transform_indices = @transform_2, window_bounds = array<i64: 1, 128>}, {transform_indices = @transform_3, window_bounds = array<i64: 24, 128>}]} {
    %c0 = arith.constant 0 : index
    %c0_0 = arith.constant 0 : index
    %0 = vector.load %arg1[%c0, %c0_0] : memref<24x128xf32, #tpu.memory_space<vmem>>, vector<24x128xf32>
    %c0_1 = arith.constant 0 : index
    %c0_2 = arith.constant 0 : index
    %1 = vector.load %arg2[%c0_1, %c0_2] : memref<24x128xi8, #tpu.memory_space<vmem>>, vector<24x128xi8>
    %2 = arith.sitofp %1 : vector<24x128xi8> to vector<24x128xf32>
    %cst = arith.constant 0.000000e+00 : f32
    %3 = vector.broadcast %cst : f32 to vector<24x128xf32>
    %4 = arith.subf %3, %0 : vector<24x128xf32>
    %cst_3 = arith.constant 0.000000e+00 : f32
    %5 = vector.broadcast %cst_3 : f32 to vector<24x128xf32>
    %6 = arith.maximumf %4, %5 : vector<24x128xf32>
    %7 = vector.broadcast %cst_3 : f32 to vector<24x128xf32>
    %8 = arith.subf %4, %7 : vector<24x128xf32>
    %9 = arith.cmpf one, %8, %8 : vector<24x128xf32>
    %10 = vector.broadcast %cst_3 : f32 to vector<24x128xf32>
    %11 = arith.addf %4, %10 : vector<24x128xf32>
    %12 = math.absf %8 : vector<24x128xf32>
    %cst_4 = arith.constant 0.000000e+00 : f32
    %13 = vector.broadcast %cst_4 : f32 to vector<24x128xf32>
    %14 = arith.subf %13, %12 : vector<24x128xf32>
    %15 = math.exp %14 : vector<24x128xf32>
    %16 = math.log1p %15 : vector<24x128xf32>
    %17 = arith.addf %6, %16 : vector<24x128xf32>
    %18 = arith.select %9, %11, %17 : vector<24x128xi1>, vector<24x128xf32>
    %cst_5 = arith.constant 0.000000e+00 : f32
    %19 = vector.broadcast %cst_5 : f32 to vector<24x128xf32>
    %20 = arith.subf %19, %18 : vector<24x128xf32>
    %21 = arith.subf %20, %0 : vector<24x128xf32>
    %22 = arith.mulf %2, %20 : vector<24x128xf32>
    %c0_6 = arith.constant 0 : index
    %c0_7 = arith.constant 0 : index
    %23 = vector.load %arg3[%c0_6, %c0_7] : memref<1x128xf32, #tpu.memory_space<vmem>>, vector<1x128xf32>
    %24 = vector.broadcast %23 : vector<1x128xf32> to vector<24x128xf32>
    %25 = arith.mulf %22, %24 : vector<24x128xf32>
    %cst_8 = arith.constant 0.000000e+00 : f32
    %26 = vector.broadcast %cst_8 : f32 to vector<24x128xf32>
    %27 = arith.subf %26, %25 : vector<24x128xf32>
    %cst_9 = arith.constant 1.000000e+00 : f32
    %28 = vector.broadcast %cst_9 : f32 to vector<24x128xf32>
    %29 = arith.subf %28, %2 : vector<24x128xf32>
    %30 = arith.mulf %29, %21 : vector<24x128xf32>
    %31 = arith.subf %27, %30 : vector<24x128xf32>
    %cst_10 = arith.constant 1.000000e+00 : f32
    %32 = vector.broadcast %cst_10 : f32 to vector<24x128xf32>
    %33 = arith.cmpf oeq, %2, %32 : vector<24x128xf32>
    %34 = arith.select %33, %21, %20 : vector<24x128xi1>, vector<24x128xf32>
    %cst_11 = arith.constant 2.000000e+00 : f32
    %35 = vector.broadcast %cst_11 : f32 to vector<24x128xf32>
    %36 = arith.mulf %35, %34 : vector<24x128xf32>
    %37 = math.exp %36 : vector<24x128xf32>
    %38 = arith.mulf %37, %31 : vector<24x128xf32>
    %cst_12 = arith.constant -1.000000e+00 : f32
    %39 = vector.broadcast %cst_12 : f32 to vector<24x128xf32>
    %40 = arith.cmpf one, %2, %39 : vector<24x128xf32>
    %cst_13 = arith.constant 9.99999974E-6 : f32
    %41 = vector.broadcast %cst_13 : f32 to vector<24x128xf32>
    %42 = arith.cmpf oge, %38, %41 : vector<24x128xf32>
    %43 = arith.andi %40, %42 : vector<24x128xi1>
    %cst_14 = arith.constant 0.000000e+00 : f32
    %44 = vector.broadcast %cst_14 : f32 to vector<24x128xf32>
    %45 = arith.select %43, %38, %44 : vector<24x128xi1>, vector<24x128xf32>
    %c0_15 = arith.constant 0 : index
    %c0_16 = arith.constant 0 : index
    %46 = vector.load %arg4[%c0_15, %c0_16] : memref<24x128xf32, #tpu.memory_space<vmem>>, vector<24x128xf32>
    tpu.vector_store %arg4[%c0_15, %c0_16], %45 {strides = array<i32>} : memref<24x128xf32, #tpu.memory_space<vmem>>, vector<24x128xf32>,
    return
  }
  func.func @transform_0(%arg0: i32) -> (i32, i32) {
    %c0_i32 = arith.constant 0 : i32
    %c0_i32_0 = arith.constant 0 : i32
    return %arg0, %c0_i32 : i32, i32
  }
  func.func @transform_1(%arg0: i32) -> (i32, i32) {
    %c0_i32 = arith.constant 0 : i32
    %c0_i32_0 = arith.constant 0 : i32
    return %arg0, %c0_i32 : i32, i32
  }
  func.func @transform_2(%arg0: i32) -> (i32, i32) {
    %c0_i32 = arith.constant 0 : i32
    %c0_i32_0 = arith.constant 0 : i32
    %c0_i32_1 = arith.constant 0 : i32
    return %c0_i32, %c0_i32_0 : i32, i32
  }
  func.func @transform_3(%arg0: i32) -> (i32, i32) {
    %c0_i32 = arith.constant 0 : i32
    %c0_i32_0 = arith.constant 0 : i32
    return %arg0, %c0_i32 : i32, i32
  }
}

</mosaic_0001>

<llo_original>
// kernel: tpu_custom_call.1
$region0: #{tpu_custom_call.1}
  #allocation0 [shape = 'u32[]', space=smem, size = 0x4, offset = 0x4, fixed_abs, tag = 'smem constant byte address 0x4 - core index']
  #allocation1 [shape = 'u32[144,128]{1,0:T(1,128)}', space=vmem, size = 0x12000, scoped, tag = 'internal scratch']
  %s0 = inlined_call_operand.hbm [shape: f32[33,128], index: 0, kind: input, shape index: {}]
  %s1 = inlined_call_operand.hbm [shape: s8[33,128], index: 1, kind: input, shape index: {}]
  %s2 = inlined_call_operand.vmem [shape: f32[1,128], index: 2, kind: input, shape index: {}]
  %s3 = inlined_call_operand.hbm [shape: f32[33,128], index: 3, kind: output, shape index: {}]
  %s4 = sld [smem:[#allocation0]]
  $region53: #{tpu_custom_call.1} parent=0
    _
  %s6 = ssub.s32 1, %s4
  %s7 = scalar_select 0, %s6, %s4
  $region1: #{tpu_custom_call.1} parent=0
    #allocation2 [shape = 'u8[24576]{0}', space=vmem, size = 0x6000, scoped, tag = 'input window, operand 0']
    #allocation3 [shape = 's32[2]{0}', space=sflag, size = 0x8, scoped, tag = 'scoped memory for tpu_custom_call.1']
    #allocation4 [shape = 's32[2]{0}', space=sflag, size = 0x8, scoped, tag = 'scoped memory for tpu_custom_call.1']
    #allocation5 [shape = 'u8[6144]{0}', space=vmem, size = 0x1800, scoped, tag = 'input window, operand 1']
    #allocation6 [shape = 's32[2]{0}', space=sflag, size = 0x8, scoped, tag = 'scoped memory for tpu_custom_call.1']
    #allocation7 [shape = 'u8[24576]{0}', space=vmem, size = 0x6000, scoped, tag = 'output window, operand 0']
    %8 = vsyncpa [#allocation3], 0
    %s9 = scalar_lea.sflag [#allocation3], 1
    %10 = vsyncpa %s9, 0
    %11 = vsyncpa [#allocation6], 0
    %s12 = scalar_lea.sflag [#allocation6], 1
    %13 = vsyncpa %s12, 0
    %14 = vsyncpa [#allocation4], 0
    %s15 = scalar_lea.sflag [#allocation4], 1
    %16 = vsyncpa %s15, 0
    loop: start=0, step=1, limit=4
    $region2: #{tpu_custom_call.1} parent=1 // loop_pre_header
      _
    $region3: #{tpu_custom_call.1} parent=1 // loop_header
      %s18 = sphi 0, %s22
      %p19 = scmp.ge.s32.totalorder %s18, 4
      %s28 = sphi 0, %s30
      %s31 = sphi 0, %s28
      %s32 = sphi 0, %s31
      %s48 = sphi 0, %s32
      %s54 = sphi 0, %s56
      %s57 = sphi 0, %s54
      %s58 = sphi 0, %s57
      %s74 = sphi 0, %s58
      %s78 = sphi 0, %s78
      %s80 = sphi 0, %s78
      %s81 = sphi 0, %s80
      %s95 = sphi 0, %s81
      %s101 = sphi 0, %s103
      %s104 = sphi 0, %s101
      %s105 = sphi 0, %s104
      %s121 = sphi 0, %s105
    $region4: #{tpu_custom_call.1} parent=1 // loop_header_branch
      %21 = sbr.rel (%p19) target = $region8
    $region5: #{tpu_custom_call.1} parent=1 // loop_body
      %s23 = ssub.s32 %s18, 1
      %s24 = ssub.s32 %s18, 2
      %s25 = sadd.s32 %s18, 1
      %s26 = ssub.s32 %s18, %s25
      %p27 = scmp.eq.s32.totalorder %s26, 0
      %s29 = sadd.s32 %s28, 1
      %s30 = scalar_select %p27, %s28, %s29
      %p33 = pneg %p27
      %p34 = scmp.eq.s32.totalorder %s18, 1
      %p35 = por %p33, %p34
      %p36 = scmp.ne.s32.totalorder %s28, %s31
      %p37 = scmp.eq.s32.totalorder %s18, 0
      %p38 = por %p36, %p37
      %p39 = scmp.ne.s32.totalorder %s28, %s31
      %p40 = scmp.eq.s32.totalorder %s23, 1
      %p41 = por %p39, %p40
      %p42 = scmp.ne.s32.totalorder %s31, %s32
      %p43 = scmp.eq.s32.totalorder %s23, 0
      %p44 = por %p42, %p43
      %p45 = scmp.ne.s32.totalorder %s31, %s32
      %p46 = scmp.eq.s32.totalorder %s24, 1
      %p47 = por %p45, %p46
      %p49 = scmp.ne.s32.totalorder %s32, %s48
      %p50 = scmp.eq.s32.totalorder %s24, 0
      %p51 = por %p49, %p50
      %s52 = ssub.s32 %s18, %s25
      %p53 = scmp.eq.s32.totalorder %s52, 0
      %s55 = sadd.s32 %s54, 1
      %s56 = scalar_select %p53, %s54, %s55
      %p59 = pneg %p53
      %p60 = scmp.eq.s32.totalorder %s18, 1
      %p61 = por %p59, %p60
      %p62 = scmp.ne.s32.totalorder %s54, %s57
      %p63 = scmp.eq.s32.totalorder %s18, 0
      %p64 = por %p62, %p63
      %p65 = scmp.ne.s32.totalorder %s54, %s57
      %p66 = scmp.eq.s32.totalorder %s23, 1
      %p67 = por %p65, %p66
      %p68 = scmp.ne.s32.totalorder %s57, %s58
      %p69 = scmp.eq.s32.totalorder %s23, 0
      %p70 = por %p68, %p69
      %p71 = scmp.ne.s32.totalorder %s57, %s58
      %p72 = scmp.eq.s32.totalorder %s24, 1
      %p73 = por %p71, %p72
      %p75 = scmp.ne.s32.totalorder %s58, %s74
      %p76 = scmp.eq.s32.totalorder %s24, 0
      %p77 = por %p75, %p76
      %s79 = sadd.s32 %s78, 1
      %p82 = scmp.eq.s32.totalorder %s18, 1
      %p83 = scmp.ne.s32.totalorder %s78, %s80
      %p84 = scmp.eq.s32.totalorder %s18, 0
      %p85 = por %p83, %p84
      %p86 = scmp.ne.s32.totalorder %s78, %s80
      %p87 = scmp.eq.s32.totalorder %s23, 1
      %p88 = por %p86, %p87
      %p89 = scmp.ne.s32.totalorder %s80, %s81
      %p90 = scmp.eq.s32.totalorder %s23, 0
      %p91 = por %p89, %p90
      %p92 = scmp.ne.s32.totalorder %s80, %s81
      %p93 = scmp.eq.s32.totalorder %s24, 1
      %p94 = por %p92, %p93
      %p96 = scmp.ne.s32.totalorder %s81, %s95
      %p97 = scmp.eq.s32.totalorder %s24, 0
      %p98 = por %p96, %p97
      %s99 = ssub.s32 %s18, %s25
      %p100 = scmp.eq.s32.totalorder %s99, 0
      %s102 = sadd.s32 %s101, 1
      %s103 = scalar_select %p100, %s101, %s102
      %p106 = pneg %p100
      %p107 = scmp.eq.s32.totalorder %s18, 1
      %p108 = por %p106, %p107
      %p109 = scmp.ne.s32.totalorder %s101, %s104
      %p110 = scmp.eq.s32.totalorder %s18, 0
      %p111 = por %p109, %p110
      %p112 = scmp.ne.s32.totalorder %s101, %s104
      %p113 = scmp.eq.s32.totalorder %s23, 1
      %p114 = por %p112, %p113
      %p115 = scmp.ne.s32.totalorder %s104, %s105
      %p116 = scmp.eq.s32.totalorder %s23, 0
      %p117 = por %p115, %p116
      %p118 = scmp.ne.s32.totalorder %s104, %s105
      %p119 = scmp.eq.s32.totalorder %s24, 1
      %p120 = por %p118, %p119
      %p122 = scmp.ne.s32.totalorder %s105, %s121
      %p123 = scmp.eq.s32.totalorder %s24, 0
      %p124 = por %p122, %p123
      %p125 = scmp.le.s32.totalorder 1, %s18
      %p126 = scmp.lt.s32.totalorder %s18, 3
      %p127 = pnand %p125, %p126
      %p128 = pneg %p127
      // Predicated region
      $region9: #{tpu_custom_call.1} parent=5 // pred_check
        _
      $region10: #{tpu_custom_call.1} parent=5 // pred_check_branch
        %130 = sbr.rel (%p127) target = $region12
      $region11: #{tpu_custom_call.1} parent=5 // pred_region
        %s131 = ssub.s32 %s18, 1
        // Predicated region
        $region13: #{tpu_custom_call.1} parent=11 // pred_check
          %p132 = pneg %p91
        $region14: #{tpu_custom_call.1} parent=11 // pred_check_branch
          %134 = sbr.rel (%p132) target = $region16
        $region15: #{tpu_custom_call.1} parent=11 // pred_region
          _
        $region16: #{tpu_custom_call.1} parent=11 // pred_fallthru
          _
      $region12: #{tpu_custom_call.1} parent=5 // pred_fallthru
        _
      %p135 = scmp.lt.s32.totalorder %s18, 2
      // Predicated region
      $region17: #{tpu_custom_call.1} parent=5 // pred_check
        %p136 = pneg %p135
      $region18: #{tpu_custom_call.1} parent=5 // pred_check_branch
        %138 = sbr.rel (%p136) target = $region20
      $region19: #{tpu_custom_call.1} parent=5 // pred_region
        // Predicated region
        $region21: #{tpu_custom_call.1} parent=19 // pred_check
          %p139 = pneg %p38
        $region22: #{tpu_custom_call.1} parent=19 // pred_check_branch
          %141 = sbr.rel (%p139) target = $region24
        $region23: #{tpu_custom_call.1} parent=19 // pred_region
          %s142 = sand.u32 %s28, 1
          %s143 = scalar_lea.sflag [#allocation3], %s142
          %s144 = sand.u32 %s28, 1
          %s145 = smul.addr %s144, 24
          %s146 = scalar_lea.vmem [#allocation2], %s145
          %s147 = smul.u32 3, %s18
          %s148 = ssub.s32 5, %s147
          %p149 = scmp.lt.s32.totalorder %s148, 3
          %s150 = scalar_select %p149, %s148, 3
          %s151 = smul.u32 128, %s150
          %s153 = ssub.s32 384, %s151
          %154 = vsyncadd %s143, %s153
          %p155 = scmp.ne.s32.totalorder 0, %s151
          %s156 = smul.addr %s147, 128
          %s157 = scalar_lea.hbm %s0, %s156
          %s158 = smul.u32 8, %s150
          %s159 = sshll.u32 %s146, 4
          %s160 = int_to_ptr.vmem [resolvable:$true] %s159
          %s161 = sshll.u32 %s158, 4
          %165 = dma.hbm_to_vmem [thread:$0]  (%p155), %s157, %s161, %s160, %s143, 128, 128, 8
        $region24: #{tpu_custom_call.1} parent=19 // pred_fallthru
          _
        // Predicated region
        $region25: #{tpu_custom_call.1} parent=19 // pred_check
          %p166 = pneg %p64
        $region26: #{tpu_custom_call.1} parent=19 // pred_check_branch
          %168 = sbr.rel (%p166) target = $region28
        $region27: #{tpu_custom_call.1} parent=19 // pred_region
          %s169 = sand.u32 %s54, 1
          %s170 = scalar_lea.sflag [#allocation6], %s169
          %s171 = sand.u32 %s54, 1
          %s172 = smul.addr %s171, 6
          %s173 = scalar_lea.vmem [#allocation5], %s172
          %s174 = smul.u32 3, %s18
          %s175 = ssub.s32 5, %s174
          %p176 = scmp.lt.s32.totalorder %s175, 3
          %s177 = scalar_select %p176, %s175, 3
          %s178 = smul.u32 32, %s177
          %s180 = ssub.s32 96, %s178
          %181 = vsyncadd %s170, %s180
          %p182 = scmp.ne.s32.totalorder 0, %s178
          %s183 = smul.addr %s174, 32
          %s184 = scalar_lea.hbm %s1, %s183
          %s185 = smul.u32 2, %s177
          %s186 = sshll.u32 %s173, 4
          %s187 = int_to_ptr.vmem [resolvable:$true] %s186
          %s188 = sshll.u32 %s185, 4
          %192 = dma.hbm_to_vmem [thread:$0]  (%p182), %s184, %s188, %s187, %s170, 32, 32, 2
        $region28: #{tpu_custom_call.1} parent=19 // pred_fallthru
          _
      $region20: #{tpu_custom_call.1} parent=5 // pred_fallthru
        _
      %p193 = scmp.le.s32.totalorder 1, %s18
      %p194 = scmp.lt.s32.totalorder %s18, 3
      %p195 = pnand %p193, %p194
      %p196 = pneg %p195
      // Predicated region
      $region29: #{tpu_custom_call.1} parent=5 // pred_check
        _
      $region30: #{tpu_custom_call.1} parent=5 // pred_check_branch
        %198 = sbr.rel (%p195) target = $region32
      $region31: #{tpu_custom_call.1} parent=5 // pred_region
        %s199 = ssub.s32 %s18, 1
        %s200 = sand.u32 %s31, 1
        %s201 = scalar_lea.sflag [#allocation3], %s200
        %s202 = sand.u32 %s31, 1
        %s203 = smul.addr %s202, 24
        %s204 = scalar_lea.vmem [#allocation2], %s203
        // Predicated region
        $region33: #{tpu_custom_call.1} parent=31 // pred_check
          %p205 = pneg %p44
        $region34: #{tpu_custom_call.1} parent=31 // pred_check_branch
          %207 = sbr.rel (%p205) target = $region36
        $region35: #{tpu_custom_call.1} parent=31 // pred_region
          %208 = dma.done %s201, 384
        $region36: #{tpu_custom_call.1} parent=31 // pred_fallthru
          _
        %s209 = sand.u32 %s57, 1
        %s210 = scalar_lea.sflag [#allocation6], %s209
        %s211 = sand.u32 %s57, 1
        %s212 = smul.addr %s211, 6
        %s213 = scalar_lea.vmem [#allocation5], %s212
        // Predicated region
        $region37: #{tpu_custom_call.1} parent=31 // pred_check
          %p214 = pneg %p70
        $region38: #{tpu_custom_call.1} parent=31 // pred_check_branch
          %216 = sbr.rel (%p214) target = $region40
        $region39: #{tpu_custom_call.1} parent=31 // pred_region
          %217 = dma.done %s210, 96
        $region40: #{tpu_custom_call.1} parent=31 // pred_fallthru
          _
        %s218 = sand.u32 %s31, 1
        %s219 = scalar_lea.sflag [#allocation3], %s218
        %s220 = sand.u32 %s31, 1
        %s221 = smul.addr %s220, 24
        %s222 = scalar_lea.vmem [#allocation2], %s221
        %p223 = pneg %p44
        %p224 = pneg %p41
        %s225 = sand.u32 %s57, 1
        %s226 = scalar_lea.sflag [#allocation6], %s225
        %s227 = sand.u32 %s57, 1
        %s228 = smul.addr %s227, 6
        %s229 = scalar_lea.vmem [#allocation5], %s228
        %p230 = pneg %p70
        %p231 = pneg %p67
        %p232 = pneg %p91
        %p233 = pneg %p88
        %p234 = pneg %p117
        %p235 = pneg %p114
        %s236 = sand.u32 %s104, 1
        %s237 = scalar_lea.sflag [#allocation4], %s236
        %s238 = sand.u32 %s104, 1
        %s239 = smul.addr %s238, 24
        %s240 = scalar_lea.vmem [#allocation7], %s239
        %s241 = smul.u32 3, %s23
        %s242 = ssub.s32 5, %s241
        %p243 = scmp.lt.s32.totalorder %s242, 3
        %s244 = scalar_select %p243, %s242, 3
        %s245 = smul.u32 128, %s244
        %s246 = smul.u32 3, %s23
        %s247 = ssub.s32 5, %s246
        %p248 = scmp.lt.s32.totalorder %s247, 3
        %s249 = scalar_select %p248, %s247, 3
        %s250 = smul.u32 32, %s249
        %s251 = smul.u32 3, %s23
        %s252 = ssub.s32 5, %s251
        %p253 = scmp.lt.s32.totalorder %s252, 3
        %s254 = scalar_select %p253, %s252, 3
        %s255 = smul.u32 128, %s254
        %v256 = vld [vmem:[%s204] sm:$0xff]
        %v257 = vld [vmem:[%s204 + $0x8] sm:$0xff]
        %v258 = vld [vmem:[%s204 + $0x10] sm:$0xff]
        %v259 = vld [vmem:[%s213] sm:$0x3]
        %v260 = vld [vmem:[%s213 + $0x2] sm:$0x3]
        %v261 = vld [vmem:[%s213 + $0x4] sm:$0x3]
        %v262 = vunpack.c.0.s8 %v259
        %v263 = vunpack.c.0.s8 %v260
        %v264 = vunpack.c.0.s8 %v261
        %v265 = vcvt.s32.f32 %v262
        %v266 = vcvt.s32.f32 %v263
        %v267 = vcvt.s32.f32 %v264
        %v268 = vsub.f32 0.0, %v256
        %v269 = vsub.f32 0.0, %v257
        %v270 = vsub.f32 0.0, %v258
        %v271 = vmax.f32 %v268, 0.0
        %v272 = vmax.f32 %v269, 0.0
        %v273 = vmax.f32 %v270, 0.0
        %vm274 = vcmp.ne.f32.partialorder %v268, %v268
        %vm275 = vcmp.ne.f32.partialorder %v269, %v269
        %vm276 = vcmp.ne.f32.partialorder %v270, %v270
        %v277 = vadd.f32 %v268, 0.0
        %v278 = vadd.f32 %v269, 0.0
        %v279 = vadd.f32 %v270, 0.0
        %v280 = vand.u32 2147483647, %v268
        %v281 = vand.u32 2147483647, %v269
        %v282 = vand.u32 2147483647, %v270
        %v283 = vsub.f32 0.0, %v280
        %v284 = vsub.f32 0.0, %v281
        %v285 = vsub.f32 0.0, %v282
        %v286 = vmul.f32 %v283, 1.442695
        %v287 = vpow.pop %v286
        %v288 = vmul.f32 %v284, 1.442695
        %v289 = vpow.pop %v288
        %v290 = vmul.f32 %v285, 1.442695
        %v291 = vpow.pop %v290
        %v292 = vadd.f32 %v287, 1.0
        %v293 = vlog2.pop %v292
        %v294 = vmul.f32 %v293, 0.6931472
        %v295 = vmul.f32 -0.5, %v287
        %v296 = vadd.f32 %v295, 1.0
        %v297 = vmul.f32 %v296, %v287
        %v298 = vand.u32 2147483647, %v287
        %vm299 = vcmp.lt.f32.partialorder %v298, 0.0004427343
        %v300 = vsel %vm299, %v297, %v294
        %v301 = vadd.f32 %v289, 1.0
        %v302 = vlog2.pop %v301
        %v303 = vmul.f32 %v302, 0.6931472
        %v304 = vmul.f32 -0.5, %v289
        %v305 = vadd.f32 %v304, 1.0
        %v306 = vmul.f32 %v305, %v289
        %v307 = vand.u32 2147483647, %v289
        %vm308 = vcmp.lt.f32.partialorder %v307, 0.0004427343
        %v309 = vsel %vm308, %v306, %v303
        %v310 = vadd.f32 %v291, 1.0
        %v311 = vlog2.pop %v310
        %v312 = vmul.f32 %v311, 0.6931472
        %v313 = vmul.f32 -0.5, %v291
        %v314 = vadd.f32 %v313, 1.0
        %v315 = vmul.f32 %v314, %v291
        %v316 = vand.u32 2147483647, %v291
        %vm317 = vcmp.lt.f32.partialorder %v316, 0.0004427343
        %v318 = vsel %vm317, %v315, %v312
        %v319 = vadd.f32 %v271, %v300
        %v320 = vadd.f32 %v272, %v309
        %v321 = vadd.f32 %v273, %v318
        %v322 = vsel %vm274, %v277, %v319
        %v323 = vsel %vm275, %v278, %v320
        %v324 = vsel %vm276, %v279, %v321
        %v325 = vsub.f32 0.0, %v322
        %v326 = vsub.f32 0.0, %v323
        %v327 = vsub.f32 0.0, %v324
        %v328 = vsub.f32 %v325, %v256
        %v329 = vsub.f32 %v326, %v257
        %v330 = vsub.f32 %v327, %v258
        %v331 = vmul.f32 %v265, %v325
        %v332 = vmul.f32 %v266, %v326
        %v333 = vmul.f32 %v267, %v327
        %v334 = vld [vmem:[%s2] sm:$0x1]
        %v336 = vlaneseq
        %v337 = vshrl.u32 %v336, 7
        %v338 = vsub.s32 0, %v337
        %v339 = vrot.slane %v334, %v338
        %v341 = vmul.f32 %v331, %v339
        %v342 = vmul.f32 %v332, %v339
        %v343 = vmul.f32 %v333, %v339
        %v344 = vsub.f32 0.0, %v341
        %v345 = vsub.f32 0.0, %v342
        %v346 = vsub.f32 0.0, %v343
        %v347 = vsub.f32 1.0, %v265
        %v348 = vsub.f32 1.0, %v266
        %v349 = vsub.f32 1.0, %v267
        %v350 = vmul.f32 %v347, %v328
        %v351 = vmul.f32 %v348, %v329
        %v352 = vmul.f32 %v349, %v330
        %v353 = vsub.f32 %v344, %v350
        %v354 = vsub.f32 %v345, %v351
        %v355 = vsub.f32 %v346, %v352
        %vm356 = vcmp.eq.f32.partialorder %v265, 1.0
        %vm357 = vcmp.eq.f32.partialorder %v266, 1.0
        %vm358 = vcmp.eq.f32.partialorder %v267, 1.0
        %v359 = vsel %vm356, %v328, %v325
        %v360 = vsel %vm357, %v329, %v326
        %v361 = vsel %vm358, %v330, %v327
        %v362 = vmul.f32 %v359, 2.0
        %v363 = vmul.f32 %v360, 2.0
        %v364 = vmul.f32 %v361, 2.0
        %v365 = vmul.f32 %v362, 1.442695
        %v366 = vpow.pop %v365
        %v367 = vmul.f32 %v363, 1.442695
        %v368 = vpow.pop %v367
        %v369 = vmul.f32 %v364, 1.442695
        %v370 = vpow.pop %v369
        %v371 = vmul.f32 %v366, %v353
        %v372 = vmul.f32 %v368, %v354
        %v373 = vmul.f32 %v370, %v355
        %vm374 = vcmp.ne.f32.partialorder %v265, -1.0
        %vm375 = vcmp.ne.f32.partialorder %v266, -1.0
        %vm376 = vcmp.ne.f32.partialorder %v267, -1.0
        %vm377 = vcmp.ge.f32.partialorder %v371, 1e-05
        %vm378 = vcmp.ge.f32.partialorder %v372, 1e-05
        %vm379 = vcmp.ge.f32.partialorder %v373, 1e-05
        %vm380 = vmand %vm374, %vm377
        %vm381 = vmand %vm375, %vm378
        %vm382 = vmand %vm376, %vm379
        %v383 = vsel %vm380, %v371, 0.0
        %v384 = vsel %vm381, %v372, 0.0
        %v385 = vsel %vm382, %v373, 0.0
        %386 = vst [vmem:[%s240] sm:$0xff] %v383
        %387 = vst [vmem:[%s240 + $0x8] sm:$0xff] %v384
        %388 = vst [vmem:[%s240 + $0x10] sm:$0xff] %v385
        %s389 = sand.u32 %s104, 1
        %s390 = scalar_lea.sflag [#allocation4], %s389
        %s391 = sand.u32 %s104, 1
        %s392 = smul.addr %s391, 24
        %s393 = scalar_lea.vmem [#allocation7], %s392
        // Predicated region
        $region41: #{tpu_custom_call.1} parent=31 // pred_check
          %p394 = pneg %p114
        $region42: #{tpu_custom_call.1} parent=31 // pred_check_branch
          %396 = sbr.rel (%p394) target = $region44
        $region43: #{tpu_custom_call.1} parent=31 // pred_region
          %s397 = smul.u32 3, %s23
          %s398 = ssub.s32 5, %s397
          %p399 = scmp.lt.s32.totalorder %s398, 3
          %s400 = scalar_select %p399, %s398, 3
          %s401 = smul.u32 128, %s400
          %s403 = ssub.s32 384, %s401
          %404 = vsyncadd %s390, %s403
          %p405 = scmp.ne.s32.totalorder 0, %s401
          %s406 = smul.addr %s397, 128
          %s407 = scalar_lea.hbm %s3, %s406
          %s408 = smul.u32 8, %s400
          %s409 = sshll.u32 %s393, 4
          %s410 = int_to_ptr.vmem [resolvable:$true] %s409
          %s411 = sshll.u32 %s408, 4
          %415 = dma.vmem_to_hbm [thread:$0]  (%p405), %s410, %s411, %s407, %s390, 128, 128, 8
        $region44: #{tpu_custom_call.1} parent=31 // pred_fallthru
          _
      $region32: #{tpu_custom_call.1} parent=5 // pred_fallthru
        _
      %p416 = scmp.le.s32.totalorder 2, %s18
      // Predicated region
      $region45: #{tpu_custom_call.1} parent=5 // pred_check
        %p417 = pneg %p416
      $region46: #{tpu_custom_call.1} parent=5 // pred_check_branch
        %419 = sbr.rel (%p417) target = $region48
      $region47: #{tpu_custom_call.1} parent=5 // pred_region
        %s420 = ssub.s32 %s18, 2
        // Predicated region
        $region49: #{tpu_custom_call.1} parent=47 // pred_check
          %p421 = pneg %p120
        $region50: #{tpu_custom_call.1} parent=47 // pred_check_branch
          %423 = sbr.rel (%p421) target = $region52
        $region51: #{tpu_custom_call.1} parent=47 // pred_region
          %s424 = sand.u32 %s105, 1
          %s425 = scalar_lea.sflag [#allocation4], %s424
          %s426 = sand.u32 %s105, 1
          %s427 = smul.addr %s426, 24
          %s428 = scalar_lea.vmem [#allocation7], %s427
          %429 = dma.done %s425, 384
        $region52: #{tpu_custom_call.1} parent=47 // pred_fallthru
          _
      $region48: #{tpu_custom_call.1} parent=5 // pred_fallthru
        _
    $region6: #{tpu_custom_call.1} parent=1 // loop_footer
      %s22 = sadd.s32 1, %s18
    $region7: #{tpu_custom_call.1} parent=1 // loop_footer_branch
      %17 = sbr.rel target = $region3
    $region8: #{tpu_custom_call.1} parent=1 // loop_exit
      _
    %430 = vsyncpa [#allocation3], 1
    %s431 = scalar_lea.sflag [#allocation3], 1
    %432 = vsyncpa %s431, 1
    %433 = vsyncpa [#allocation6], 1
    %s434 = scalar_lea.sflag [#allocation6], 1
    %435 = vsyncpa %s434, 1
    %436 = vsyncpa [#allocation4], 1
    %s437 = scalar_lea.sflag [#allocation4], 1
    %438 = vsyncpa %s437, 1

</llo_original>
